<compile_context>
chip_gen: v7x
topology: tpu7x:2x2x1
jax: 0.10.0
libtpu: 0.0.40
codegen_flags: <defaults>
</compile_context>

<pallas_src>
import functools

import jax
import jax.numpy as jnp
from jax.experimental import pallas as pl
from jax.experimental.pallas import tpu as pltpu

H1 = 128
H2 = 32
OUT = 1

_DEFAULT_BM_CAP = 2048   # default rows/tile (perf review: 1024-2048)
_MAX_BM = 4096           # hard cap; VMEM footprint stays tiny even here


def _qnet_kernel(x_ref, w1_ref, b1_ref, w2_ref, b2_ref, w3_ref, b3_ref, o_ref):
    """Fused 3-layer MLP; writes the result as a lane-dense (1, bm) row.

    Matmul inputs are bf16 (W refs already bf16; activations cast in-kernel),
    accumulation and bias/ReLU are f32.
    """
    x = x_ref[...].astype(jnp.bfloat16)                              # (bm, D_in)
    h1 = jnp.dot(x, w1_ref[...], preferred_element_type=jnp.float32) + b1_ref[...]
    h1 = jnp.maximum(h1, 0.0)                                        # (bm, 128) f32
    h2 = jnp.dot(h1.astype(jnp.bfloat16), w2_ref[...],
                 preferred_element_type=jnp.float32) + b2_ref[...]
    h2 = jnp.maximum(h2, 0.0)                                        # (bm, 32) f32
    # Final 32 -> 1 layer: contract w3 (1,32) with h2 (bm,32) over the 32-dim,
    # giving a (1, bm) row that is already lane-dense for the store.
    q_row = jax.lax.dot_general(
        w3_ref[...], h2.astype(jnp.bfloat16),
        dimension_numbers=(((1,), (1,)), ((), ())),
        preferred_element_type=jnp.float32)                          # (1, bm)
    o_ref[...] = (q_row + b3_ref[...]).astype(o_ref.dtype)


@functools.lru_cache(maxsize=1)
def _tensorcores_per_chip():
    """Best-effort TensorCores-per-chip query (v7x=2, v5e/v6e=1)."""
    try:
        info = pltpu.get_tpu_info()
        for attr in ("tensorcores_per_chip", "num_tensorcores", "num_cores"):
            v = getattr(info, attr, None)
            if v:
                return int(v)
    except Exception:
        pass
    try:
        kind = str(getattr(jax.devices()[0], "device_kind", "") or "")
        if "7" in kind:            # "TPU7x" / "TPU v7..." -> 2 TCs per chip
            return 2
    except Exception:
        pass
    return 1


def _pick_block_m(batch, requested=None):
    """Pick the batch tile (rows per grid step).

    Rows are the sublane dim of the x tile and the lane dim of the output row,
    so bm must be a multiple of 128 (or equal the full batch for tiny inputs).
    * 1-TC chips (v5e/v6e): one tile as large as the cap allows; splitting a
      batch that fits one tile only adds per-step overhead.
    * 2-TC chips (v7x): balance the 128-row granules across cores (floor
      split) so both cores carry similar row counts even with a ragged tail.
    """
    if requested is not None:
        cap = max(128, (min(int(requested), _MAX_BM) // 128) * 128)
    else:
        cap = _DEFAULT_BM_CAP

    if batch <= 128:
        return batch                      # one full-extent block

    granules = pl.cdiv(batch, 128)        # 128-row chunks (last may be ragged)
    cores = _tensorcores_per_chip()
    if cores >= 2 and granules >= 2:
        bm = 128 * max(1, granules // cores)
    else:
        bm = 128 * granules               # single big tile (if under the cap)
    return min(cap, bm)


@functools.partial(jax.jit, static_argnames=("block_m",))
def qnetwork_forward(states_actions, params, block_m=None):
    """states_actions: (B, state_dim + action_dim) float32 -> (B, 1) float32."""
    w1, b1, w2, b2, w3, b3 = params
    # Matmul operands in bf16 (no-op if params are already stored bf16);
    # biases stay f32 (accumulator dtype).
    w1 = w1.astype(jnp.bfloat16)
    w2 = w2.astype(jnp.bfloat16)
    w3 = w3.astype(jnp.bfloat16)
    b1 = b1.astype(jnp.float32)
    b2 = b2.astype(jnp.float32)
    b3 = b3.astype(jnp.float32)

    B, d_in = states_actions.shape
    bm = _pick_block_m(B, block_m)
    grid = (pl.cdiv(B, bm),)

    out_row = pl.pallas_call(
        _qnet_kernel,
        out_shape=jax.ShapeDtypeStruct((1, B), jnp.float32),
        grid_spec=pltpu.PrefetchScalarGridSpec(
            num_scalar_prefetch=0,
            grid=grid,
            in_specs=[
                pl.BlockSpec((bm, d_in), lambda i: (i, 0)),   # x tile
                pl.BlockSpec((d_in, H1), lambda i: (0, 0)),   # W1 (resident)
                pl.BlockSpec((1, H1), lambda i: (0, 0)),      # b1
                pl.BlockSpec((H1, H2), lambda i: (0, 0)),     # W2
                pl.BlockSpec((1, H2), lambda i: (0, 0)),      # b2
                pl.BlockSpec((OUT, H2), lambda i: (0, 0)),    # W3 (1, 32)
                pl.BlockSpec((1, OUT), lambda i: (0, 0)),     # b3 (1, 1)
            ],
            out_specs=pl.BlockSpec((1, bm), lambda i: (0, i)),  # lane-dense row
        ),
        compiler_params=pltpu.CompilerParams(
            dimension_semantics=("parallel",)),
    )(states_actions, w1, b1, w2, b2, w3, b3)

    # Layout plumbing only: (1, B) -> (B, 1) to match the PyTorch signature.
    # Consumers that accept (1, B) / (B,) can skip this reshape.
    return out_row.reshape(B, OUT)


def init_params(key, state_dim, action_dim):
    """PyTorch-style U(-1/sqrt(fan_in), 1/sqrt(fan_in)) init.

    W1/W2 are stored as (fan_in, fan_out) (transposed vs PyTorch) in bf16;
    W3 keeps PyTorch's (out=1, in=32) layout, also bf16. Biases are f32 and
    2D: b1 (1,128), b2 (1,32), b3 (1,1).
    """
    d_in = state_dim + action_dim
    params = []
    for fan_in, w_shape, b_shape in [
        (d_in, (d_in, H1), (1, H1)),
        (H1, (H1, H2), (1, H2)),
        (H2, (OUT, H2), (1, OUT)),
    ]:
        key, kw, kb = jax.random.split(key, 3)
        bound = 1.0 / jnp.sqrt(float(fan_in))
        w = jax.random.uniform(kw, w_shape, jnp.float32, -bound, bound)
        b = jax.random.uniform(kb, b_shape, jnp.float32, -bound, bound)
        params += [w.astype(jnp.bfloat16), b]
    return tuple(params)


def _reference_forward(x, params):
    """Pure-JAX f32 reference (weights up-cast from their stored dtype)."""
    w1, b1, w2, b2, w3, b3 = params
    w1 = w1.astype(jnp.float32)
    w2 = w2.astype(jnp.float32)
    w3 = w3.astype(jnp.float32)
    h = jnp.maximum(x @ w1 + b1, 0.0)
    h = jnp.maximum(h @ w2 + b2, 0.0)
    return h @ w3.T + b3


if __name__ == "__main__":
    state_dim, action_dim, batch = 16, 4, 2
    d_in = state_dim + action_dim

    key = jax.random.PRNGKey(0)
    key, kx = jax.random.split(key)
    states_actions = jax.random.normal(kx, (batch, d_in), jnp.float32)

    params = init_params(key, state_dim, action_dim)

    q = jax.block_until_ready(qnetwork_forward(states_actions, params))
    q_ref = _reference_forward(states_actions, params)
    assert q.shape == (batch, OUT)
    # bf16 matmul inputs -> slightly relaxed tolerance vs the f32 reference.
    assert jnp.allclose(q, q_ref, atol=2e-2, rtol=2e-2)

    # Extra check: ragged batch (no wrapper padding), exercises the
    # generation-aware tile selection (single 384-row tile on v5e/v6e,
    # balanced 128-row tiles on v7x).
    key, kx2 = jax.random.split(key)
    x_big = jax.random.normal(kx2, (300, d_in), jnp.float32)
    q_big = jax.block_until_ready(qnetwork_forward(x_big, params))
    q_big_ref = _reference_forward(x_big, params)
    assert q_big.shape == (300, OUT)
    assert jnp.allclose(q_big, q_big_ref, atol=2e-2, rtol=2e-2)

    print("KERNEL_OK")
</pallas_src>

<mosaic_0001>
module attributes {stable_mosaic.version = 11 : i64} {
  func.func @_qnet_kernel(%arg0: i32, %arg1: memref<2x20xf32, #tpu.memory_space<vmem>>, %arg2: memref<20x128xbf16, #tpu.memory_space<vmem>>, %arg3: memref<1x128xf32, #tpu.memory_space<vmem>>, %arg4: memref<128x32xbf16, #tpu.memory_space<vmem>>, %arg5: memref<1x32xf32, #tpu.memory_space<vmem>>, %arg6: memref<1x32xbf16, #tpu.memory_space<vmem>>, %arg7: memref<1x1xf32, #tpu.memory_space<vmem>>, %arg8: memref<1x2xf32, #tpu.memory_space<vmem>>) attributes {dimension_semantics = [#tpu.dimension_semantics<parallel>], iteration_bounds = array<i64: 1>, scalar_prefetch = 0 : i64, scratch_operands = 0 : i64, tpu.core_type = #tpu.core_type<tc>, window_params = [{transform_indices = @transform_0, window_bounds = array<i64: 2, 20>}, {pipeline_mode = #tpu.pipeline_mode<synchronous>, transform_indices = @transform_1, window_bounds = array<i64: 20, 128>}, {pipeline_mode = #tpu.pipeline_mode<synchronous>, transform_indices = @transform_2, window_bounds = array<i64: 1, 128>}, {pipeline_mode = #tpu.pipeline_mode<synchronous>, transform_indices = @transform_3, window_bounds = array<i64: 128, 32>}, {pipeline_mode = #tpu.pipeline_mode<synchronous>, transform_indices = @transform_4, window_bounds = array<i64: 1, 32>}, {pipeline_mode = #tpu.pipeline_mode<synchronous>, transform_indices = @transform_5, window_bounds = array<i64: 1, 32>}, {pipeline_mode = #tpu.pipeline_mode<synchronous>, transform_indices = @transform_6, window_bounds = array<i64: 1, 1>}, {transform_indices = @transform_7, window_bounds = array<i64: 1, 2>}]} {
    %c0 = arith.constant 0 : index
    %c0_0 = arith.constant 0 : index
    %0 = vector.load %arg1[%c0, %c0_0] : memref<2x20xf32, #tpu.memory_space<vmem>>, vector<2x20xf32>
    %1 = arith.truncf %0 : vector<2x20xf32> to vector<2x20xbf16>
    %c0_1 = arith.constant 0 : index
    %c0_2 = arith.constant 0 : index
    %2 = vector.load %arg2[%c0_1, %c0_2] : memref<20x128xbf16, #tpu.memory_space<vmem>>, vector<20x128xbf16>
    %cst = arith.constant dense<0.000000e+00> : vector<2x128xf32>
    %3 = tpu.matmul %1, %2, %cst {dimension_numbers = #tpu.dot_dimension_numbers<[1], [0], [0], [1], [0, 0, 1, 1], [], []>} : vector<2x20xbf16>, vector<20x128xbf16>, vector<2x128xf32> -> vector<2x128xf32>
    %c0_3 = arith.constant 0 : index
    %c0_4 = arith.constant 0 : index
    %4 = vector.load %arg3[%c0_3, %c0_4] : memref<1x128xf32, #tpu.memory_space<vmem>>, vector<1x128xf32>
    %5 = vector.broadcast %4 : vector<1x128xf32> to vector<2x128xf32>
    %6 = arith.addf %3, %5 : vector<2x128xf32>
    %cst_5 = arith.constant 0.000000e+00 : f32
    %7 = vector.broadcast %cst_5 : f32 to vector<2x128xf32>
    %8 = arith.maximumf %6, %7 : vector<2x128xf32>
    %9 = arith.truncf %8 : vector<2x128xf32> to vector<2x128xbf16>
    %c0_6 = arith.constant 0 : index
    %c0_7 = arith.constant 0 : index
    %10 = vector.load %arg4[%c0_6, %c0_7] : memref<128x32xbf16, #tpu.memory_space<vmem>>, vector<128x32xbf16>
    %cst_8 = arith.constant dense<0.000000e+00> : vector<2x32xf32>
    %11 = tpu.matmul %9, %10, %cst_8 {dimension_numbers = #tpu.dot_dimension_numbers<[1], [0], [0], [1], [0, 0, 1, 1], [], []>} : vector<2x128xbf16>, vector<128x32xbf16>, vector<2x32xf32> -> vector<2x32xf32>
    %c0_9 = arith.constant 0 : index
    %c0_10 = arith.constant 0 : index
    %12 = vector.load %arg5[%c0_9, %c0_10] : memref<1x32xf32, #tpu.memory_space<vmem>>, vector<1x32xf32>
    %13 = vector.broadcast %12 : vector<1x32xf32> to vector<2x32xf32>
    %14 = arith.addf %11, %13 : vector<2x32xf32>
    %cst_11 = arith.constant 0.000000e+00 : f32
    %15 = vector.broadcast %cst_11 : f32 to vector<2x32xf32>
    %16 = arith.maximumf %14, %15 : vector<2x32xf32>
    %c0_12 = arith.constant 0 : index
    %c0_13 = arith.constant 0 : index
    %17 = vector.load %arg6[%c0_12, %c0_13] : memref<1x32xbf16, #tpu.memory_space<vmem>>, vector<1x32xbf16>
    %18 = arith.truncf %16 : vector<2x32xf32> to vector<2x32xbf16>
    %cst_14 = arith.constant dense<0.000000e+00> : vector<1x2xf32>
    %19 = tpu.matmul %17, %18, %cst_14 {dimension_numbers = #tpu.dot_dimension_numbers<[1], [1], [0], [0], [0, 0, 1, 0], [], []>} : vector<1x32xbf16>, vector<2x32xbf16>, vector<1x2xf32> -> vector<1x2xf32>
    %c0_15 = arith.constant 0 : index
    %c0_16 = arith.constant 0 : index
    %20 = vector.load %arg7[%c0_15, %c0_16] : memref<1x1xf32, #tpu.memory_space<vmem>>, vector<1x1xf32>
    %21 = vector.broadcast %20 : vector<1x1xf32> to vector<1x2xf32>
    %22 = arith.addf %19, %21 : vector<1x2xf32>
    %c0_17 = arith.constant 0 : index
    %c0_18 = arith.constant 0 : index
    %23 = vector.load %arg8[%c0_17, %c0_18] : memref<1x2xf32, #tpu.memory_space<vmem>>, vector<1x2xf32>
    tpu.vector_store %arg8[%c0_17, %c0_18], %22 {strides = array<i32>} : memref<1x2xf32, #tpu.memory_space<vmem>>, vector<1x2xf32>,
    return
  }
  func.func @transform_0(%arg0: i32) -> (i32, i32) {
    %c0_i32 = arith.constant 0 : i32
    %c0_i32_0 = arith.constant 0 : i32
    return %arg0, %c0_i32 : i32, i32
  }
  func.func @transform_1(%arg0: i32) -> (i32, i32) {
    %c0_i32 = arith.constant 0 : i32
    %c0_i32_0 = arith.constant 0 : i32
    %c0_i32_1 = arith.constant 0 : i32
    return %c0_i32, %c0_i32_0 : i32, i32
  }
  func.func @transform_2(%arg0: i32) -> (i32, i32) {
    %c0_i32 = arith.constant 0 : i32
    %c0_i32_0 = arith.constant 0 : i32
    %c0_i32_1 = arith.constant 0 : i32
    return %c0_i32, %c0_i32_0 : i32, i32
  }
  func.func @transform_3(%arg0: i32) -> (i32, i32) {
    %c0_i32 = arith.constant 0 : i32
    %c0_i32_0 = arith.constant 0 : i32
    %c0_i32_1 = arith.constant 0 : i32
    return %c0_i32, %c0_i32_0 : i32, i32
  }
  func.func @transform_4(%arg0: i32) -> (i32, i32) {
    %c0_i32 = arith.constant 0 : i32
    %c0_i32_0 = arith.constant 0 : i32
    %c0_i32_1 = arith.constant 0 : i32
    return %c0_i32, %c0_i32_0 : i32, i32
  }
  func.func @transform_5(%arg0: i32) -> (i32, i32) {
    %c0_i32 = arith.constant 0 : i32
    %c0_i32_0 = arith.constant 0 : i32
    %c0_i32_1 = arith.constant 0 : i32
    return %c0_i32, %c0_i32_0 : i32, i32
  }
  func.func @transform_6(%arg0: i32) -> (i32, i32) {
    %c0_i32 = arith.constant 0 : i32
    %c0_i32_0 = arith.constant 0 : i32
    %c0_i32_1 = arith.constant 0 : i32
    return %c0_i32, %c0_i32_0 : i32, i32
  }
  func.func @transform_7(%arg0: i32) -> (i32, i32) {
    %c0_i32 = arith.constant 0 : i32
    %c0_i32_0 = arith.constant 0 : i32
    return %c0_i32, %arg0 : i32, i32
  }
}

</mosaic_0001>

<llo_original>
// kernel: qnetwork_forward.1
$region0: #{qnetwork_forward.1}
  #allocation0 [shape = 'u32[]', space=smem, size = 0x4, offset = 0x4, fixed_abs, tag = 'smem constant byte address 0x4 - core index']
  #allocation1 [shape = 'u32[144,128]{1,0:T(1,128)}', space=vmem, size = 0x12000, scoped, tag = 'internal scratch']
  #allocation2 [shape = 'f32[1,1]{1,0:T(1,128)S(1)}', space=vmem, size = 0x200, scoped, tag = 'scoped memory for qnetwork_forward.1']
  %s0 = inlined_call_operand.vmem [shape: f32[2,20], index: 0, kind: input, shape index: {}]
  %s1 = inlined_call_operand.vmem [shape: bf16[20,128], index: 1, kind: input, shape index: {}]
  %s2 = inlined_call_operand.vmem [shape: f32[1,128], index: 2, kind: input, shape index: {}]
  %s3 = inlined_call_operand.vmem [shape: bf16[128,32], index: 3, kind: input, shape index: {}]
  %s4 = inlined_call_operand.vmem [shape: f32[1,32], index: 4, kind: input, shape index: {}]
  %s5 = inlined_call_operand.vmem [shape: bf16[1,32], index: 5, kind: input, shape index: {}]
  %s6 = inlined_call_operand.<no memory space> [shape: f32[1,1], index: 6, kind: input, shape index: {}]
  %s7 = inlined_call_operand.hbm [shape: f32[1,2], index: 7, kind: output, shape index: {}]
  %s8 = sld [smem:[#allocation0]]
  $region38: #{qnetwork_forward.1} parent=0
    _
  %s10 = ssub.s32 1, %s8
  %s11 = scalar_select 0, %s10, %s8
  %v12 = vstv %s6
  %13 = vst [vmem:[#allocation2] sm:$0x1] %v12
  $region1: #{qnetwork_forward.1} parent=0
    #allocation3 [shape = 'u8[512]{0}', space=vmem, size = 0x400, scoped, tag = 'output window, operand 0, single buffered']
    #allocation4 [shape = 's32[1]{0}', space=sflag, size = 0x4, scoped, tag = 'scoped memory for qnetwork_forward.1']
    %14 = vsyncpa [#allocation4], 0
    // Predicated region
    $region2: #{qnetwork_forward.1} parent=1 // pred_check
      _
    $region3: #{qnetwork_forward.1} parent=1 // pred_check_branch
      %16 = sbr.rel (0) target = $region5
    $region4: #{qnetwork_forward.1} parent=1 // pred_region
      _
    $region5: #{qnetwork_forward.1} parent=1 // pred_fallthru
      _
    // Predicated region
    $region6: #{qnetwork_forward.1} parent=1 // pred_check
      _
    $region7: #{qnetwork_forward.1} parent=1 // pred_check_branch
      %18 = sbr.rel (0) target = $region9
    $region8: #{qnetwork_forward.1} parent=1 // pred_region
      _
    $region9: #{qnetwork_forward.1} parent=1 // pred_fallthru
      _
    // Predicated region
    $region10: #{qnetwork_forward.1} parent=1 // pred_check
      _
    $region11: #{qnetwork_forward.1} parent=1 // pred_check_branch
      %20 = sbr.rel (0) target = $region13
    $region12: #{qnetwork_forward.1} parent=1 // pred_region
      _
    $region13: #{qnetwork_forward.1} parent=1 // pred_fallthru
      _
    // Predicated region
    $region14: #{qnetwork_forward.1} parent=1 // pred_check
      _
    $region15: #{qnetwork_forward.1} parent=1 // pred_check_branch
      %22 = sbr.rel (0) target = $region17
    $region16: #{qnetwork_forward.1} parent=1 // pred_region
      _
    $region17: #{qnetwork_forward.1} parent=1 // pred_fallthru
      _
    // Predicated region
    $region18: #{qnetwork_forward.1} parent=1 // pred_check
      _
    $region19: #{qnetwork_forward.1} parent=1 // pred_check_branch
      %24 = sbr.rel (0) target = $region21
    $region20: #{qnetwork_forward.1} parent=1 // pred_region
      _
    $region21: #{qnetwork_forward.1} parent=1 // pred_fallthru
      _
    // Predicated region
    $region22: #{qnetwork_forward.1} parent=1 // pred_check
      _
    $region23: #{qnetwork_forward.1} parent=1 // pred_check_branch
      %26 = sbr.rel (0) target = $region25
    $region24: #{qnetwork_forward.1} parent=1 // pred_region
      _
    $region25: #{qnetwork_forward.1} parent=1 // pred_fallthru
      _
    // Predicated region
    $region26: #{qnetwork_forward.1} parent=1 // pred_check
      _
    $region27: #{qnetwork_forward.1} parent=1 // pred_check_branch
      %28 = sbr.rel (0) target = $region29
    $region28: #{qnetwork_forward.1} parent=1 // pred_region
      _
    $region29: #{qnetwork_forward.1} parent=1 // pred_fallthru
      _
    %v30 = vld [vmem:[%s0] sm:$0x3]
    %v31 = vpack.c.bf16 %v30, %v30
    %v32 = vld [vmem:[%s1] sm:$0xf]
    %v33 = vld [vmem:[%s1 + $0x4] sm:$0xf]
    %v34 = vld [vmem:[%s1 + $0x8] sm:$0x3]
    %v35 = vld [vmem:[%s2] sm:$0x1]
    %v37 = vlaneseq
    %v38 = vshrl.u32 %v37, 7
    %v39 = vsub.s32 0, %v38
    %v40 = vrot.slane %v35, %v39
    %v45 = vunpack.c.l.b16 %v32
    %v46 = vunpack.c.l.b16 %v33
    %v47 = vunpack.c.l.b16 %v34
    %v48 = vpack.c.b16 %v46, %v45
    %v49 = vpack.c.b16 %v47, %v47
    %vm51 = vcmask 162816
    %v53 = vsel %vm51, %v31, 0
    %vm55 = vcmask 1041408
    %v57 = vsel %vm55, %v49, 0
    %59 = vmatprep.subr.bf16.mxu0 0
    %60 = vmatpush1.bf16.msra.mxu0 %v48
    %61 = vmatprep.subr.bf16.mxu0 0
    %62 = vmatpush1.bf16.msra.mxu0 %v57
    %63 = vmatprep.subr.bf16.mxu0 0
    %64 = vmatpush1.bf16.msra.mxu0 0
    %65 = vmatprep.subr.bf16.mxu0 0
    %66 = vmatpush1.bf16.msra.mxu0 0
    %67 = vmatprep.subr.bf16.mxu0 0
    %68 = vmatpush1.bf16.msra.mxu0 0
    %69 = vmatprep.subr.bf16.mxu0 0
    %70 = vmatpush1.bf16.msra.mxu0 0
    %71 = vmatprep.subr.bf16.mxu0 0
    %72 = vmatpush1.bf16.msra.mxu0 0
    %73 = vmatprep.subr.bf16.mxu0 0
    %74 = vmatpush1.bf16.msra.mxu0 0
    %75 = vmatprep.subr.bf16.mxu0 0
    %76 = vmatpush1.bf16.msra.mxu0 0
    %77 = vmatprep.subr.bf16.mxu0 0
    %78 = vmatpush1.bf16.msra.mxu0 0
    %79 = vmatprep.subr.bf16.mxu0 0
    %80 = vmatpush1.bf16.msra.mxu0 0
    %81 = vmatprep.subr.bf16.mxu0 0
    %82 = vmatpush1.bf16.msra.mxu0 0
    %83 = vmatprep.subr.bf16.mxu0 0
    %84 = vmatpush1.bf16.msra.mxu0 0
    %85 = vmatprep.subr.bf16.mxu0 0
    %86 = vmatpush1.bf16.msra.mxu0 0
    %87 = vmatprep.subr.bf16.mxu0 0
    %88 = vmatpush1.bf16.msra.mxu0 0
    %89 = vmatprep.subr.bf16.mxu0 0
    %90 = vmatpush1.bf16.msra.mxu0 0
    %91 = vmatprep.mubr.bf16.mxu0 0
    %92 = vmatmul.mubr.bf16.gmra.mrb[0].mxu0 %v53
    %v93 = vpop.f32.mrb[0].mxu0
    %v94 = vadd.f32 %v40, %v93
    %v95 = vpop.f32.mrb[0].mxu0
    %v96 = vpop.f32.mrb[0].mxu0
    %v97 = vpop.f32.mrb[0].mxu0
    %98 = vdwg.mxu0
    %v99 = vmax.f32 %v94, 0.0
    %v100 = vpack.c.bf16 %v99, %v99
    %v101 = vld [vmem:[%s3] sm:$0xf]
    %v102 = vld [vmem:[%s3 + $0x4] sm:$0xf]
    %v103 = vld [vmem:[%s3 + $0x8] sm:$0xf]
    %v104 = vld [vmem:[%s3 + $0xc] sm:$0xf]
    %v105 = vld [vmem:[%s3 + $0x10] sm:$0xf]
    %v106 = vld [vmem:[%s3 + $0x14] sm:$0xf]
    %v107 = vld [vmem:[%s3 + $0x18] sm:$0xf]
    %v108 = vld [vmem:[%s3 + $0x1c] sm:$0xf]
    %v109 = vld [vmem:[%s3 + $0x20] sm:$0xf]
    %v110 = vld [vmem:[%s3 + $0x24] sm:$0xf]
    %v111 = vld [vmem:[%s3 + $0x28] sm:$0xf]
    %v112 = vld [vmem:[%s3 + $0x2c] sm:$0xf]
    %v113 = vld [vmem:[%s3 + $0x30] sm:$0xf]
    %v114 = vld [vmem:[%s3 + $0x34] sm:$0xf]
    %v115 = vld [vmem:[%s3 + $0x38] sm:$0xf]
    %v116 = vld [vmem:[%s3 + $0x3c] sm:$0xf]
    %v117 = vld [vmem:[%s4] sm:$0x1]
    %v119 = vlaneseq
    %v120 = vshrl.u32 %v119, 7
    %v121 = vsub.s32 0, %v120
    %v122 = vrot.slane %v117, %v121
    %v140 = vunpack.c.l.b16 %v101
    %v141 = vunpack.c.l.b16 %v102
    %v142 = vunpack.c.l.b16 %v103
    %v143 = vunpack.c.l.b16 %v104
    %v144 = vunpack.c.l.b16 %v105
    %v145 = vunpack.c.l.b16 %v106
    %v146 = vunpack.c.l.b16 %v107
    %v147 = vunpack.c.l.b16 %v108
    %v148 = vunpack.c.l.b16 %v109
    %v149 = vunpack.c.l.b16 %v110
    %v150 = vunpack.c.l.b16 %v111
    %v151 = vunpack.c.l.b16 %v112
    %v152 = vunpack.c.l.b16 %v113
    %v153 = vunpack.c.l.b16 %v114
    %v154 = vunpack.c.l.b16 %v115
    %v155 = vunpack.c.l.b16 %v116
    %v156 = vpack.c.b16 %v141, %v140
    %v157 = vpack.c.b16 %v143, %v142
    %v158 = vpack.c.b16 %v145, %v144
    %v159 = vpack.c.b16 %v147, %v146
    %v160 = vpack.c.b16 %v149, %v148
    %v161 = vpack.c.b16 %v151, %v150
    %v162 = vpack.c.b16 %v153, %v152
    %v163 = vpack.c.b16 %v155, %v154
    %172 = vmatprep.subr.bf16.mxu0 0
    %173 = vmatpush1.bf16.msra.mxu0 %v156
    %174 = vmatprep.subr.bf16.mxu0 0
    %175 = vmatpush1.bf16.msra.mxu0 %v157
    %176 = vmatprep.subr.bf16.mxu0 0
    %177 = vmatpush1.bf16.msra.mxu0 %v158
    %178 = vmatprep.subr.bf16.mxu0 0
    %179 = vmatpush1.bf16.msra.mxu0 %v159
    %180 = vmatprep.subr.bf16.mxu0 0
    %181 = vmatpush1.bf16.msra.mxu0 %v160
    %182 = vmatprep.subr.bf16.mxu0 0
    %183 = vmatpush1.bf16.msra.mxu0 %v161
    %184 = vmatprep.subr.bf16.mxu0 0
    %185 = vmatpush1.bf16.msra.mxu0 %v162
    %186 = vmatprep.subr.bf16.mxu0 0
    %187 = vmatpush1.bf16.msra.mxu0 %v163
    %188 = vmatprep.subr.bf16.mxu0 0
    %189 = vmatpush1.bf16.msra.mxu0 0
    %190 = vmatprep.subr.bf16.mxu0 0
    %191 = vmatpush1.bf16.msra.mxu0 0
    %192 = vmatprep.subr.bf16.mxu0 0
    %193 = vmatpush1.bf16.msra.mxu0 0
    %194 = vmatprep.subr.bf16.mxu0 0
    %195 = vmatpush1.bf16.msra.mxu0 0
    %196 = vmatprep.subr.bf16.mxu0 0
    %197 = vmatpush1.bf16.msra.mxu0 0
    %198 = vmatprep.subr.bf16.mxu0 0
    %199 = vmatpush1.bf16.msra.mxu0 0
    %200 = vmatprep.subr.bf16.mxu0 0
    %201 = vmatpush1.bf16.msra.mxu0 0
    %202 = vmatprep.subr.bf16.mxu0 0
    %203 = vmatpush1.bf16.msra.mxu0 0
    %204 = vmatprep.mubr.bf16.mxu0 0
    %205 = vmatmul.mubr.bf16.gmra.mrb[0].mxu0 %v100
    %v206 = vpop.f32.mrb[0].mxu0
    %v207 = vadd.f32 %v122, %v206
    %v208 = vpop.f32.mrb[0].mxu0
    %v209 = vpop.f32.mrb[0].mxu0
    %v210 = vpop.f32.mrb[0].mxu0
    %211 = vdwg.mxu0
    %v212 = vmax.f32 %v207, 0.0
    %v213 = vld [vmem:[%s5] sm:$0x1]
    %v214 = vpack.c.bf16 %v212, %v212
    %v215 = vld [vmem:[#allocation2] sm:$0x1]
    %217 = vset.pattern.permute.xlu0 0
    %218 = vperm.xlu0 %217, %v215
    %v219 = vpop.permute.xlu0 %218
    %v221 = vlaneseq
    %v222 = vshrl.u32 %v221, 7
    %v223 = vsub.s32 0, %v222
    %v224 = vrot.slane %v219, %v223
    %vm225 = vcmask 261120
    %v227 = vsel %vm225, %v213, 0
    %v230 = vsel %vm225, %v214, 0
    %232 = vmatprep.subr.bf16.mxu0 0
    %233 = vmatpush1.bf16.xpose.msra.mxu0 %v230
    %234 = vmatprep.subr.bf16.mxu0 0
    %235 = vmatpush1.bf16.xpose.msra.mxu0 0
    %236 = vmatprep.subr.bf16.mxu0 0
    %237 = vmatpush1.bf16.xpose.msra.mxu0 0
    %238 = vmatprep.subr.bf16.mxu0 0
    %239 = vmatpush1.bf16.xpose.msra.mxu0 0
    %240 = vmatprep.subr.bf16.mxu0 0
    %241 = vmatpush1.bf16.xpose.msra.mxu0 0
    %242 = vmatprep.subr.bf16.mxu0 0
    %243 = vmatpush1.bf16.xpose.msra.mxu0 0
    %244 = vmatprep.subr.bf16.mxu0 0
    %245 = vmatpush1.bf16.xpose.msra.mxu0 0
    %246 = vmatprep.subr.bf16.mxu0 0
    %247 = vmatpush1.bf16.xpose.msra.mxu0 0
    %248 = vmatprep.subr.bf16.mxu0 0
    %249 = vmatpush1.bf16.xpose.msra.mxu0 0
    %250 = vmatprep.subr.bf16.mxu0 0
    %251 = vmatpush1.bf16.xpose.msra.mxu0 0
    %252 = vmatprep.subr.bf16.mxu0 0
    %253 = vmatpush1.bf16.xpose.msra.mxu0 0
    %254 = vmatprep.subr.bf16.mxu0 0
    %255 = vmatpush1.bf16.xpose.msra.mxu0 0
    %256 = vmatprep.subr.bf16.mxu0 0
    %257 = vmatpush1.bf16.xpose.msra.mxu0 0
    %258 = vmatprep.subr.bf16.mxu0 0
    %259 = vmatpush1.bf16.xpose.msra.mxu0 0
    %260 = vmatprep.subr.bf16.mxu0 0
    %261 = vmatpush1.bf16.xpose.msra.mxu0 0
    %262 = vmatprep.subr.bf16.mxu0 0
    %263 = vmatpush1.bf16.xpose.msra.mxu0 0
    %264 = vmatprep.mubr.bf16.mxu0 0
    %265 = vmatmul.mubr.bf16.gmra.mrb[0].mxu0 %v227
    %v266 = vpop.f32.mrb[0].mxu0
    %v267 = vadd.f32 %v224, %v266
    %v268 = vpop.f32.mrb[0].mxu0
    %v269 = vpop.f32.mrb[0].mxu0
    %v270 = vpop.f32.mrb[0].mxu0
    %271 = vdwg.mxu0
    %vm272 = vcmask 8192
    %273 = vst.msk [vmem:[#allocation3] sm:$0x1] %vm272, %v267
    // Predicated region
    $region30: #{qnetwork_forward.1} parent=1 // pred_check
      _
    $region31: #{qnetwork_forward.1} parent=1 // pred_check_branch
      %275 = sbr.rel (0) target = $region33
    $region32: #{qnetwork_forward.1} parent=1 // pred_region
      %s277 = ssub.s32 16, 16
      %278 = vsyncadd [#allocation4], %s277
      %s280 = sshll.u32 [#allocation3], 4
      %s281 = int_to_ptr.vmem [resolvable:$true] %s280
      %283 = dma.vmem_to_hbm [thread:$0]  %s281, 16, %s7, [#allocation4]
    $region33: #{qnetwork_forward.1} parent=1 // pred_fallthru
      _
    // Predicated region
    $region34: #{qnetwork_forward.1} parent=1 // pred_check
      _
    $region35: #{qnetwork_forward.1} parent=1 // pred_check_branch
      %285 = sbr.rel (0) target = $region37
    $region36: #{qnetwork_forward.1} parent=1 // pred_region
      %286 = dma.done [#allocation4], 16
    $region37: #{qnetwork_forward.1} parent=1 // pred_fallthru
      _
    %287 = vsyncpa [#allocation4], 1

</llo_original>
